<compile_context>
chip_gen: v5e
topology: v5e:2x2
jax: 0.10.0
libtpu: 0.0.40
codegen_flags: <defaults>
</compile_context>

<pallas_src>
import jax
import jax.numpy as jnp
from jax import lax
from jax.experimental import pallas as pl
from jax.experimental.pallas import tpu as pltpu

_LANES = 128
_SUBLANES = 8
_MAX_SLAB_ROWS = 256   # rows per inner compute slab (32 f32 vregs per operand)


def _round_up(x: int, m: int) -> int:
    return ((x + m - 1) // m) * m


def _make_kernel(tile_rows: int, slab: int, tiles_per_core: int):
    num_slabs = tile_rows // slab
    groups = slab // _SUBLANES
    tile_elems = tile_rows * _LANES

    def kernel(n_ref, pred_ref, gold_ref, out_ref, acc_ref):
        # n_ref   : (1,) int32 SMEM  — number of valid elements
        # pred_ref: (tile_rows, 128) f32  VMEM
        # gold_ref: (tile_rows, 128) i32  VMEM
        # out_ref : (8, 128) f32 — this half's per-lane partial sums
        # acc_ref : (8, 128) f32 scratch — running per-lane partials
        c = pl.program_id(0)     # which half of the row range ("parallel", TC shard)
        i = pl.program_id(1)     # tile within this half ("arbitrary", reduction)

        @pl.when(i == 0)
        def _init():
            acc_ref[...] = jnp.zeros_like(acc_ref)

        n = n_ref[0]
        tile_idx = c * tiles_per_core + i        # logical (unclamped) tile id
        base_elem = tile_idx * tile_elems        # first logical element of tile

        def make_slab_body(masked: bool):
            if masked:
                # Hoisted out of the fori_loop: local element index within a slab.
                row_io = lax.broadcasted_iota(jnp.int32, (slab, _LANES), 0)
                lane_io = lax.broadcasted_iota(jnp.int32, (slab, _LANES), 1)
                local_idx = row_io * _LANES + lane_io

            def body(s, carry):
                r0 = pl.multiple_of(s * slab, slab)
                p = pred_ref[pl.ds(r0, slab), :]
                g = gold_ref[pl.ds(r0, slab), :]
                # Single EUP log per element: log(where(gold == 1, p, 1 - p)).
                arg = jnp.where(g == 1, p, 1.0 - p)
                if masked:
                    # Mask the log ARGUMENT so garbage/padded tails give log(1)=0
                    # (never NaN) and contribute nothing to the sum.
                    idx = local_idx + (base_elem + r0 * _LANES)
                    arg = jnp.where(idx < n, arg, 1.0)
                ll = jnp.log(arg)
                # Fold the slab onto the (8,128) accumulator: pure VALU adds,
                # no cross-lane traffic, no full-tile intermediate.
                acc_ref[...] += jnp.sum(ll.reshape(groups, _SUBLANES, _LANES),
                                        axis=0)
                return carry

            return body

        fully_valid = (base_elem + tile_elems) <= n

        @pl.when(fully_valid)
        def _fast():        # interior tiles: no masking work at all
            lax.fori_loop(0, num_slabs, make_slab_body(False), 0)

        @pl.when(jnp.logical_not(fully_valid))
        def _edge():        # boundary / padded / phantom tiles
            lax.fori_loop(0, num_slabs, make_slab_body(True), 0)

        @pl.when(i == pl.num_programs(1) - 1)
        def _finalize():
            out_ref[...] = acc_ref[...]

    return kernel


def my_loss(pred: jax.Array, gold: jax.Array, *,
            max_rows_per_tile: int = 8192) -> jax.Array:
    """pred: (N,) float probabilities in (0,1); gold: (N,) integer labels.

    Returns scalar f32 loss, matching myLoss.forward semantics.
    """
    n = pred.shape[0]

    pred = jnp.asarray(pred)
    if pred.dtype != jnp.float32:
        pred = pred.astype(jnp.float32)
    gold = jnp.asarray(gold)
    if gold.dtype != jnp.int32:
        gold = gold.astype(jnp.int32)

    # ---- geometry -----------------------------------------------------------
    rows = max(1, -(-n // _LANES))                       # lane-dense rows
    mrpt = max(1, int(max_rows_per_tile))
    slab = min(_MAX_SLAB_ROWS, _round_up(rows, _SUBLANES),
               _round_up(mrpt, _SUBLANES))
    tile_rows = min(_round_up(rows, slab), _round_up(mrpt, slab))

    # Single-tile case: pad rows up to the tile (cheap — at most one tile of
    # data) so the block never exceeds the array.  Multi-tile case: no row
    # padding — the partial last block is garbage-filled by Pallas and fully
    # handled by the in-kernel element-index mask.
    rows_store = tile_rows if rows <= tile_rows else rows
    num_row_blocks = -(-rows_store // tile_rows)
    tiles_per_core = -(-num_row_blocks // 2)             # split across 2 TCs (v7x)

    total_elems = rows_store * _LANES
    pad = total_elems - n
    if pad:
        pred = jnp.pad(pred, (0, pad))
        gold = jnp.pad(gold, (0, pad))
    pred2d = pred.reshape(rows_store, _LANES)            # free reshape when pad == 0
    gold2d = gold.reshape(rows_store, _LANES)

    n_arr = jnp.full((1,), n, dtype=jnp.int32)           # scalar-prefetched valid count

    last_block = num_row_blocks - 1

    def in_map(c, i, n_ref):
        # Clamp phantom tiles (second half's overhang when the block count is
        # odd) onto the last real block; their contribution is masked out via
        # the *logical* element index inside the kernel.
        blk = jnp.minimum(c * tiles_per_core + i, last_block)
        return (blk, 0)

    kernel = _make_kernel(tile_rows, slab, tiles_per_core)

    # 2 input arrays x 2 pipeline buffers x tile bytes, plus headroom.
    vmem_limit = 4 * tile_rows * _LANES * 4 + (8 << 20)

    out = pl.pallas_call(
        kernel,
        out_shape=jax.ShapeDtypeStruct((2 * _SUBLANES, _LANES), jnp.float32),
        grid_spec=pltpu.PrefetchScalarGridSpec(
            num_scalar_prefetch=1,
            grid=(2, tiles_per_core),
            in_specs=[
                pl.BlockSpec((tile_rows, _LANES), in_map),
                pl.BlockSpec((tile_rows, _LANES), in_map),
            ],
            out_specs=pl.BlockSpec((_SUBLANES, _LANES),
                                   lambda c, i, n_ref: (c, 0)),
            scratch_shapes=[pltpu.VMEM((_SUBLANES, _LANES), jnp.float32)],
        ),
        compiler_params=pltpu.CompilerParams(
            dimension_semantics=("parallel", "arbitrary"),
            vmem_limit_bytes=vmem_limit,
        ),
        cost_estimate=pl.CostEstimate(
            flops=6 * total_elems,
            transcendentals=total_elems,
            bytes_accessed=8 * total_elems + 2 * _SUBLANES * _LANES * 4,
        ),
    )(n_arr, pred2d, gold2d)

    # Two (8,128) lane-dense per-core partials -> scalar (tiny XLA epilogue).
    return -jnp.sum(out)


def my_loss_ref(pred, gold):
    g = (gold == 1).astype(jnp.float32)
    p = pred.astype(jnp.float32)
    return -jnp.sum(g * jnp.log(p) + (1.0 - g) * jnp.log(1.0 - p))


if __name__ == "__main__":
    key = jax.random.PRNGKey(0)
    k1, k2, k3, k4, k5, k6 = jax.random.split(key, 6)

    # 1) Small case matching the module's typical usage (short sequence).
    N = 8
    pred = jax.random.uniform(k1, (N,), minval=0.05, maxval=0.95,
                              dtype=jnp.float32)
    gold = jax.random.randint(k2, (N,), 0, 3, dtype=jnp.int32)  # labels in {0,1,2}
    loss = my_loss(pred, gold)
    jax.block_until_ready(loss)
    ref = my_loss_ref(pred, gold)
    assert jnp.allclose(loss, ref, rtol=1e-5, atol=1e-5), (loss, ref)

    # 2) Multi-tile streaming, both grid halves, partial last block, masking.
    N2 = 5000
    pred2 = jax.random.uniform(k3, (N2,), minval=0.05, maxval=0.95,
                               dtype=jnp.float32)
    gold2 = jax.random.randint(k4, (N2,), 0, 3, dtype=jnp.int32)
    loss2 = my_loss(pred2, gold2, max_rows_per_tile=16)
    jax.block_until_ready(loss2)
    ref2 = my_loss_ref(pred2, gold2)
    assert jnp.allclose(loss2, ref2, rtol=1e-4, atol=1e-4), (loss2, ref2)

    # 3) Multi-slab inner fori_loop within a tile + phantom tile on 2nd half.
    N3 = 66000
    pred3 = jax.random.uniform(k5, (N3,), minval=0.05, maxval=0.95,
                               dtype=jnp.float32)
    gold3 = jax.random.randint(k6, (N3,), 0, 3, dtype=jnp.int32)
    loss3 = my_loss(pred3, gold3, max_rows_per_tile=1024)
    jax.block_until_ready(loss3)
    ref3 = my_loss_ref(pred3, gold3)
    assert jnp.allclose(loss3, ref3, rtol=1e-4, atol=1e-4), (loss3, ref3)

    print("KERNEL_OK")
</pallas_src>

<mosaic_0001>
module attributes {stable_mosaic.version = 11 : i64} {
  func.func @kernel(%arg0: i32, %arg1: i32, %arg2: memref<1xi32, #tpu.memory_space<smem>>, %arg3: memref<8x128xf32, #tpu.memory_space<vmem>>, %arg4: memref<8x128xi32, #tpu.memory_space<vmem>>, %arg5: memref<8x128xf32, #tpu.memory_space<vmem>>, %arg6: memref<8x128xf32, #tpu.memory_space<vmem>>) attributes {dimension_semantics = [#tpu.dimension_semantics<parallel>, #tpu.dimension_semantics<arbitrary>], iteration_bounds = array<i64: 2, 1>, scalar_prefetch = 1 : i64, scratch_operands = 1 : i64, tpu.core_type = #tpu.core_type<tc>, window_params = [{transform_indices = @transform_0, window_bounds = array<i64: 8, 128>}, {transform_indices = @transform_1, window_bounds = array<i64: 8, 128>}, {transform_indices = @transform_2, window_bounds = array<i64: 8, 128>}]} {
    %c0_i32 = arith.constant 0 : i32
    %0 = arith.cmpi eq, %arg1, %c0_i32 : i32
    %1 = arith.extui %0 : i1 to i32
    %c0_i32_0 = arith.constant 0 : i32
    %2 = arith.cmpi ne, %1, %c0_i32_0 : i32
    scf.if %2 {
      %cst = arith.constant 0.000000e+00 : f32
      %17 = vector.broadcast %cst : f32 to vector<8x128xf32>
      %c0_6 = arith.constant 0 : index
      %c0_7 = arith.constant 0 : index
      %18 = vector.load %arg6[%c0_6, %c0_7] : memref<8x128xf32, #tpu.memory_space<vmem>>, vector<8x128xf32>
      tpu.vector_store %arg6[%c0_6, %c0_7], %17 {strides = array<i32>} : memref<8x128xf32, #tpu.memory_space<vmem>>, vector<8x128xf32>,
    } else {
    }
    %c0 = arith.constant 0 : index
    %3 = memref.load %arg2[%c0] : memref<1xi32, #tpu.memory_space<smem>>
    %c1_i32 = arith.constant 1 : i32
    %4 = arith.muli %arg0, %c1_i32 : i32
    %5 = arith.addi %4, %arg1 : i32
    %c1024_i32 = arith.constant 1024 : i32
    %6 = arith.muli %5, %c1024_i32 : i32
    %c1024_i32_1 = arith.constant 1024 : i32
    %7 = arith.addi %6, %c1024_i32_1 : i32
    %8 = arith.cmpi sle, %7, %3 : i32
    %9 = arith.extui %8 : i1 to i32
    %c0_i32_2 = arith.constant 0 : i32
    %10 = arith.cmpi ne, %9, %c0_i32_2 : i32
    scf.if %10 {
      %c0_i32_6 = arith.constant 0 : i32
      %c8_i32 = arith.constant 8 : i32
      %17 = arith.muli %c0_i32_6, %c8_i32 : i32
      %18 = tpu.assume_multiple %17, 8 : i32
      %19 = arith.index_cast %18 : i32 to index
      %c0_7 = arith.constant 0 : index
      %20 = vector.load %arg3[%19, %c0_7] : memref<8x128xf32, #tpu.memory_space<vmem>>, vector<8x128xf32>
      %21 = arith.index_cast %18 : i32 to index
      %c0_8 = arith.constant 0 : index
      %22 = vector.load %arg4[%21, %c0_8] : memref<8x128xi32, #tpu.memory_space<vmem>>, vector<8x128xi32>
      %c1_i32_9 = arith.constant 1 : i32
      %23 = vector.broadcast %c1_i32_9 : i32 to vector<8x128xi32>
      %24 = arith.cmpi eq, %22, %23 : vector<8x128xi32>
      %cst = arith.constant 1.000000e+00 : f32
      %25 = vector.broadcast %cst : f32 to vector<8x128xf32>
      %26 = arith.subf %25, %20 : vector<8x128xf32>
      %27 = arith.select %24, %20, %26 : vector<8x128xi1>, vector<8x128xf32>
      %28 = math.log %27 : vector<8x128xf32>
      %c0_10 = arith.constant 0 : index
      %c0_11 = arith.constant 0 : index
      %29 = vector.load %arg6[%c0_10, %c0_11] : memref<8x128xf32, #tpu.memory_space<vmem>>, vector<8x128xf32>
      %30 = vector.shape_cast %28 : vector<8x128xf32> to vector<1x8x128xf32>
      %cst_12 = arith.constant dense<0.000000e+00> : vector<8x128xf32>
      %31 = vector.multi_reduction <add>, %30, %cst_12 [0] : vector<1x8x128xf32> to vector<8x128xf32>
      %32 = arith.addf %29, %31 : vector<8x128xf32>
      %c0_13 = arith.constant 0 : index
      %c0_14 = arith.constant 0 : index
      %33 = vector.load %arg6[%c0_13, %c0_14] : memref<8x128xf32, #tpu.memory_space<vmem>>, vector<8x128xf32>
      tpu.vector_store %arg6[%c0_13, %c0_14], %32 {strides = array<i32>} : memref<8x128xf32, #tpu.memory_space<vmem>>, vector<8x128xf32>,
      %c1_i32_15 = arith.constant 1 : i32
    } else {
    }
    %true = arith.constant true
    %11 = arith.xori %8, %true : i1
    %12 = arith.extui %11 : i1 to i32
    %c0_i32_3 = arith.constant 0 : i32
    %13 = arith.cmpi ne, %12, %c0_i32_3 : i32
    scf.if %13 {
      %17 = tpu.iota {dimensions = array<i32: 0>} : vector<8x128xi32>
      %18 = tpu.iota {dimensions = array<i32: 1>} : vector<8x128xi32>
      %c128_i32 = arith.constant 128 : i32
      %19 = vector.broadcast %c128_i32 : i32 to vector<8x128xi32>
      %20 = arith.muli %17, %19 : vector<8x128xi32>
      %21 = arith.addi %20, %18 : vector<8x128xi32>
      %c0_i32_6 = arith.constant 0 : i32
      %c8_i32 = arith.constant 8 : i32
      %22 = arith.muli %c0_i32_6, %c8_i32 : i32
      %23 = tpu.assume_multiple %22, 8 : i32
      %24 = arith.index_cast %23 : i32 to index
      %c0_7 = arith.constant 0 : index
      %25 = vector.load %arg3[%24, %c0_7] : memref<8x128xf32, #tpu.memory_space<vmem>>, vector<8x128xf32>
      %26 = arith.index_cast %23 : i32 to index
      %c0_8 = arith.constant 0 : index
      %27 = vector.load %arg4[%26, %c0_8] : memref<8x128xi32, #tpu.memory_space<vmem>>, vector<8x128xi32>
      %c1_i32_9 = arith.constant 1 : i32
      %28 = vector.broadcast %c1_i32_9 : i32 to vector<8x128xi32>
      %29 = arith.cmpi eq, %27, %28 : vector<8x128xi32>
      %cst = arith.constant 1.000000e+00 : f32
      %30 = vector.broadcast %cst : f32 to vector<8x128xf32>
      %31 = arith.subf %30, %25 : vector<8x128xf32>
      %32 = arith.select %29, %25, %31 : vector<8x128xi1>, vector<8x128xf32>
      %c128_i32_10 = arith.constant 128 : i32
      %33 = arith.muli %23, %c128_i32_10 : i32
      %34 = arith.addi %6, %33 : i32
      %35 = vector.broadcast %34 : i32 to vector<8x128xi32>
      %36 = arith.addi %21, %35 : vector<8x128xi32>
      %37 = vector.broadcast %3 : i32 to vector<8x128xi32>
      %38 = arith.cmpi slt, %36, %37 : vector<8x128xi32>
      %cst_11 = arith.constant 1.000000e+00 : f32
      %39 = vector.broadcast %cst_11 : f32 to vector<8x128xf32>
      %40 = arith.select %38, %32, %39 : vector<8x128xi1>, vector<8x128xf32>
      %41 = math.log %40 : vector<8x128xf32>
      %c0_12 = arith.constant 0 : index
      %c0_13 = arith.constant 0 : index
      %42 = vector.load %arg6[%c0_12, %c0_13] : memref<8x128xf32, #tpu.memory_space<vmem>>, vector<8x128xf32>
      %43 = vector.shape_cast %41 : vector<8x128xf32> to vector<1x8x128xf32>
      %cst_14 = arith.constant dense<0.000000e+00> : vector<8x128xf32>
      %44 = vector.multi_reduction <add>, %43, %cst_14 [0] : vector<1x8x128xf32> to vector<8x128xf32>
      %45 = arith.addf %42, %44 : vector<8x128xf32>
      %c0_15 = arith.constant 0 : index
      %c0_16 = arith.constant 0 : index
      %46 = vector.load %arg6[%c0_15, %c0_16] : memref<8x128xf32, #tpu.memory_space<vmem>>, vector<8x128xf32>
      tpu.vector_store %arg6[%c0_15, %c0_16], %45 {strides = array<i32>} : memref<8x128xf32, #tpu.memory_space<vmem>>, vector<8x128xf32>,
      %c1_i32_17 = arith.constant 1 : i32
    } else {
    }
    %c0_i32_4 = arith.constant 0 : i32
    %14 = arith.cmpi eq, %arg1, %c0_i32_4 : i32
    %15 = arith.extui %14 : i1 to i32
    %c0_i32_5 = arith.constant 0 : i32
    %16 = arith.cmpi ne, %15, %c0_i32_5 : i32
    scf.if %16 {
      %c0_6 = arith.constant 0 : index
      %c0_7 = arith.constant 0 : index
      %17 = vector.load %arg6[%c0_6, %c0_7] : memref<8x128xf32, #tpu.memory_space<vmem>>, vector<8x128xf32>
      %c0_8 = arith.constant 0 : index
      %c0_9 = arith.constant 0 : index
      %18 = vector.load %arg5[%c0_8, %c0_9] : memref<8x128xf32, #tpu.memory_space<vmem>>, vector<8x128xf32>
      tpu.vector_store %arg5[%c0_8, %c0_9], %17 {strides = array<i32>} : memref<8x128xf32, #tpu.memory_space<vmem>>, vector<8x128xf32>,
    } else {
    }
    return
  }
  func.func @transform_0(%arg0: i32, %arg1: i32, %arg2: memref<1xi32, #tpu.memory_space<smem>>) -> (i32, i32) {
    %c1_i32 = arith.constant 1 : i32
    %0 = arith.muli %arg0, %c1_i32 : i32
    %1 = arith.addi %0, %arg1 : i32
    %c0_i32 = arith.constant 0 : i32
    %2 = arith.minsi %1, %c0_i32 : i32
    %c0_i32_0 = arith.constant 0 : i32
    %c0_i32_1 = arith.constant 0 : i32
    return %2, %c0_i32_0 : i32, i32
  }
  func.func @transform_1(%arg0: i32, %arg1: i32, %arg2: memref<1xi32, #tpu.memory_space<smem>>) -> (i32, i32) {
    %c1_i32 = arith.constant 1 : i32
    %0 = arith.muli %arg0, %c1_i32 : i32
    %1 = arith.addi %0, %arg1 : i32
    %c0_i32 = arith.constant 0 : i32
    %2 = arith.minsi %1, %c0_i32 : i32
    %c0_i32_0 = arith.constant 0 : i32
    %c0_i32_1 = arith.constant 0 : i32
    return %2, %c0_i32_0 : i32, i32
  }
  func.func @transform_2(%arg0: i32, %arg1: i32, %arg2: memref<1xi32, #tpu.memory_space<smem>>) -> (i32, i32) {
    %c0_i32 = arith.constant 0 : i32
    %c0_i32_0 = arith.constant 0 : i32
    return %arg0, %c0_i32 : i32, i32
  }
}

</mosaic_0001>

<llo_original>
// kernel: tpu_custom_call.1
$region0: #{tpu_custom_call.1}
  #allocation0 [shape = 'u32[]', space=smem, size = 0x4, offset = 0x4, fixed_abs, tag = 'smem constant byte address 0x4 - core index']
  #allocation1 [shape = 'u32[72,128]{1,0:T(1,128)}', space=vmem, size = 0x9000, scoped, tag = 'internal scratch']
  #allocation2 [shape = 'f32[8,128]{1,0:T(8,128)}', space=vmem, size = 0x1000, scoped, tag = 'scratch operand']
  #allocation3 [shape = 's32[1]{0}', space=sflag, size = 0x4, scoped, tag = 'scoped memory for tpu_custom_call.1']
  #allocation4 [shape = 's32[1]{0:T(128)S(6)}', space=smem, size = 0x200, scoped, tag = 'prefetched SMEM operand 0']
  %s0 = inlined_call_operand.<no memory space> [shape: s32[1], index: 0, kind: input, shape index: {}]
  %s1 = inlined_call_operand.hbm [shape: f32[8,128], index: 1, kind: input, shape index: {}]
  %s2 = inlined_call_operand.hbm [shape: s32[8,128], index: 2, kind: input, shape index: {}]
  %s3 = inlined_call_operand.hbm [shape: f32[16,128], index: 3, kind: output, shape index: {}]
  %s4 = sld [smem:[#allocation0]]
  $region65: #{tpu_custom_call.1} parent=0
    _
  %s6 = ssub.s32 1, %s4
  %s7 = scalar_select 0, %s6, %s4
  %8 = sst [smem:[#allocation4]] %s0
  $region1: #{tpu_custom_call.1} parent=0
    #allocation5 [shape = 'u8[8192]{0}', space=vmem, size = 0x2000, scoped, tag = 'input window, operand 1']
    #allocation6 [shape = 's32[2]{0}', space=sflag, size = 0x8, scoped, tag = 'scoped memory for tpu_custom_call.1']
    #allocation7 [shape = 's32[2]{0}', space=sflag, size = 0x8, scoped, tag = 'scoped memory for tpu_custom_call.1']
    #allocation8 [shape = 'u8[8192]{0}', space=vmem, size = 0x2000, scoped, tag = 'input window, operand 2']
    #allocation9 [shape = 's32[2]{0}', space=sflag, size = 0x8, scoped, tag = 'scoped memory for tpu_custom_call.1']
    #allocation10 [shape = 'u8[8192]{0}', space=vmem, size = 0x2000, scoped, tag = 'output window, operand 0']
    %9 = vsyncpa [#allocation6], 0
    %s10 = scalar_lea.sflag [#allocation6], 1
    %11 = vsyncpa %s10, 0
    %12 = vsyncpa [#allocation9], 0
    %s13 = scalar_lea.sflag [#allocation9], 1
    %14 = vsyncpa %s13, 0
    %15 = vsyncpa [#allocation7], 0
    %s16 = scalar_lea.sflag [#allocation7], 1
    %17 = vsyncpa %s16, 0
    loop: start=0, step=1, limit=4
    $region2: #{tpu_custom_call.1} parent=1 // loop_pre_header
      _
    $region3: #{tpu_custom_call.1} parent=1 // loop_header
      %s19 = sphi 0, %s23
      %p20 = scmp.ge.s32.totalorder %s19, 4
      %s26 = sphi 0, %s38
      %s27 = sphi 0, %s34
      %s28 = sphi 0, %s26
      %s29 = sphi 0, %s27
      %s30 = sphi 0, %s28
      %s31 = sphi 0, %s29
      %s47 = sphi 0, %s49
      %s50 = sphi 0, %s47
      %s51 = sphi 0, %s50
      %s67 = sphi 0, %s51
      %s79 = sphi 0, %s81
      %s82 = sphi 0, %s79
      %s83 = sphi 0, %s82
      %s99 = sphi 0, %s83
      %s105 = sphi 0, %s107
      %s108 = sphi 0, %s105
      %s109 = sphi 0, %s108
      %s125 = sphi 0, %s109
    $region4: #{tpu_custom_call.1} parent=1 // loop_header_branch
      %22 = sbr.rel (%p20) target = $region8
    $region5: #{tpu_custom_call.1} parent=1 // loop_body
      %s24 = ssub.s32 %s19, 1
      %s25 = ssub.s32 %s19, 2
      %s32 = sadd.s32 1, %s27
      %p33 = scmp.ge.s32.totalorder %s32, 1
      %s34 = scalar_select %p33, 0, %s32
      %s35 = sadd.s32 1, %s26
      %s36 = scalar_select %p33, %s35, %s26
      %p37 = scmp.ge.s32.totalorder %s36, 2
      %s38 = scalar_select %p37, 0, %s36
      %s39 = sadd.s32 %s26, %s27
      %p40 = scmp.lt.s32.totalorder %s39, 0
      %s41 = scalar_select %p40, %s39, 0
      %s42 = sadd.s32 %s38, %s34
      %p43 = scmp.lt.s32.totalorder %s42, 0
      %s44 = scalar_select %p43, %s42, 0
      %s45 = ssub.s32 %s41, %s44
      %p46 = scmp.eq.s32.totalorder %s45, 0
      %s48 = sadd.s32 %s47, 1
      %s49 = scalar_select %p46, %s47, %s48
      %p52 = pneg %p46
      %p53 = scmp.eq.s32.totalorder %s19, 1
      %p54 = por %p52, %p53
      %p55 = scmp.ne.s32.totalorder %s47, %s50
      %p56 = scmp.eq.s32.totalorder %s19, 0
      %p57 = por %p55, %p56
      %p58 = scmp.ne.s32.totalorder %s47, %s50
      %p59 = scmp.eq.s32.totalorder %s24, 1
      %p60 = por %p58, %p59
      %p61 = scmp.ne.s32.totalorder %s50, %s51
      %p62 = scmp.eq.s32.totalorder %s24, 0
      %p63 = por %p61, %p62
      %p64 = scmp.ne.s32.totalorder %s50, %s51
      %p65 = scmp.eq.s32.totalorder %s25, 1
      %p66 = por %p64, %p65
      %p68 = scmp.ne.s32.totalorder %s51, %s67
      %p69 = scmp.eq.s32.totalorder %s25, 0
      %p70 = por %p68, %p69
      %s71 = sadd.s32 %s26, %s27
      %p72 = scmp.lt.s32.totalorder %s71, 0
      %s73 = scalar_select %p72, %s71, 0
      %s74 = sadd.s32 %s38, %s34
      %p75 = scmp.lt.s32.totalorder %s74, 0
      %s76 = scalar_select %p75, %s74, 0
      %s77 = ssub.s32 %s73, %s76
      %p78 = scmp.eq.s32.totalorder %s77, 0
      %s80 = sadd.s32 %s79, 1
      %s81 = scalar_select %p78, %s79, %s80
      %p84 = pneg %p78
      %p85 = scmp.eq.s32.totalorder %s19, 1
      %p86 = por %p84, %p85
      %p87 = scmp.ne.s32.totalorder %s79, %s82
      %p88 = scmp.eq.s32.totalorder %s19, 0
      %p89 = por %p87, %p88
      %p90 = scmp.ne.s32.totalorder %s79, %s82
      %p91 = scmp.eq.s32.totalorder %s24, 1
      %p92 = por %p90, %p91
      %p93 = scmp.ne.s32.totalorder %s82, %s83
      %p94 = scmp.eq.s32.totalorder %s24, 0
      %p95 = por %p93, %p94
      %p96 = scmp.ne.s32.totalorder %s82, %s83
      %p97 = scmp.eq.s32.totalorder %s25, 1
      %p98 = por %p96, %p97
      %p100 = scmp.ne.s32.totalorder %s83, %s99
      %p101 = scmp.eq.s32.totalorder %s25, 0
      %p102 = por %p100, %p101
      %s103 = ssub.s32 %s26, %s38
      %p104 = scmp.eq.s32.totalorder %s103, 0
      %s106 = sadd.s32 %s105, 1
      %s107 = scalar_select %p104, %s105, %s106
      %p110 = pneg %p104
      %p111 = scmp.eq.s32.totalorder %s19, 1
      %p112 = por %p110, %p111
      %p113 = scmp.ne.s32.totalorder %s105, %s108
      %p114 = scmp.eq.s32.totalorder %s19, 0
      %p115 = por %p113, %p114
      %p116 = scmp.ne.s32.totalorder %s105, %s108
      %p117 = scmp.eq.s32.totalorder %s24, 1
      %p118 = por %p116, %p117
      %p119 = scmp.ne.s32.totalorder %s108, %s109
      %p120 = scmp.eq.s32.totalorder %s24, 0
      %p121 = por %p119, %p120
      %p122 = scmp.ne.s32.totalorder %s108, %s109
      %p123 = scmp.eq.s32.totalorder %s25, 1
      %p124 = por %p122, %p123
      %p126 = scmp.ne.s32.totalorder %s109, %s125
      %p127 = scmp.eq.s32.totalorder %s25, 0
      %p128 = por %p126, %p127
      %p129 = scmp.le.s32.totalorder 1, %s19
      %p130 = scmp.lt.s32.totalorder %s19, 3
      %p131 = pnand %p129, %p130
      %p132 = pneg %p131
      // Predicated region
      $region9: #{tpu_custom_call.1} parent=5 // pred_check
        _
      $region10: #{tpu_custom_call.1} parent=5 // pred_check_branch
        %134 = sbr.rel (%p131) target = $region12
      $region11: #{tpu_custom_call.1} parent=5 // pred_region
        %s135 = ssub.s32 %s19, 1
      $region12: #{tpu_custom_call.1} parent=5 // pred_fallthru
        _
      %p136 = scmp.lt.s32.totalorder %s19, 2
      // Predicated region
      $region13: #{tpu_custom_call.1} parent=5 // pred_check
        %p137 = pneg %p136
      $region14: #{tpu_custom_call.1} parent=5 // pred_check_branch
        %139 = sbr.rel (%p137) target = $region16
      $region15: #{tpu_custom_call.1} parent=5 // pred_region
        // Predicated region
        $region17: #{tpu_custom_call.1} parent=15 // pred_check
          %p140 = pneg %p57
        $region18: #{tpu_custom_call.1} parent=15 // pred_check_branch
          %142 = sbr.rel (%p140) target = $region20
        $region19: #{tpu_custom_call.1} parent=15 // pred_region
          %s143 = sand.u32 %s47, 1
          %s144 = scalar_lea.sflag [#allocation6], %s143
          %s145 = sand.u32 %s47, 1
          %s146 = smul.addr %s145, 8
          %s147 = scalar_lea.vmem [#allocation5], %s146
          %s148 = sadd.s32 %s26, %s27
          %p149 = scmp.lt.s32.totalorder %s148, 0
          %s150 = scalar_select %p149, %s148, 0
          %152 = vsyncadd %s144, 0
          %s153 = smul.addr %s150, 8
          %s154 = scalar_lea.hbm %s1, %s153
          %s156 = sshll.u32 %s154, 4
          %s157 = int_to_ptr.hbm [resolvable:$true] %s156
          %s158 = sshll.u32 %s147, 4
          %s159 = int_to_ptr.vmem [resolvable:$true] %s158
          %161 = dma.hbm_to_vmem [thread:$0]  %s157, 128, %s159, %s144
        $region20: #{tpu_custom_call.1} parent=15 // pred_fallthru
          _
        // Predicated region
        $region21: #{tpu_custom_call.1} parent=15 // pred_check
          %p162 = pneg %p89
        $region22: #{tpu_custom_call.1} parent=15 // pred_check_branch
          %164 = sbr.rel (%p162) target = $region24
        $region23: #{tpu_custom_call.1} parent=15 // pred_region
          %s165 = sand.u32 %s79, 1
          %s166 = scalar_lea.sflag [#allocation9], %s165
          %s167 = sand.u32 %s79, 1
          %s168 = smul.addr %s167, 8
          %s169 = scalar_lea.vmem [#allocation8], %s168
          %s170 = sadd.s32 %s26, %s27
          %p171 = scmp.lt.s32.totalorder %s170, 0
          %s172 = scalar_select %p171, %s170, 0
          %174 = vsyncadd %s166, 0
          %s175 = smul.addr %s172, 8
          %s176 = scalar_lea.hbm %s2, %s175
          %s178 = sshll.u32 %s176, 4
          %s179 = int_to_ptr.hbm [resolvable:$true] %s178
          %s180 = sshll.u32 %s169, 4
          %s181 = int_to_ptr.vmem [resolvable:$true] %s180
          %183 = dma.hbm_to_vmem [thread:$0]  %s179, 128, %s181, %s166
        $region24: #{tpu_custom_call.1} parent=15 // pred_fallthru
          _
      $region16: #{tpu_custom_call.1} parent=5 // pred_fallthru
        _
      %p184 = scmp.le.s32.totalorder 1, %s19
      %p185 = scmp.lt.s32.totalorder %s19, 3
      %p186 = pnand %p184, %p185
      %p187 = pneg %p186
      // Predicated region
      $region25: #{tpu_custom_call.1} parent=5 // pred_check
        _
      $region26: #{tpu_custom_call.1} parent=5 // pred_check_branch
        %189 = sbr.rel (%p186) target = $region28
      $region27: #{tpu_custom_call.1} parent=5 // pred_region
        %s190 = ssub.s32 %s19, 1
        %s191 = sand.u32 %s50, 1
        %s192 = scalar_lea.sflag [#allocation6], %s191
        %s193 = sand.u32 %s50, 1
        %s194 = smul.addr %s193, 8
        %s195 = scalar_lea.vmem [#allocation5], %s194
        // Predicated region
        $region29: #{tpu_custom_call.1} parent=27 // pred_check
          %p196 = pneg %p63
        $region30: #{tpu_custom_call.1} parent=27 // pred_check_branch
          %198 = sbr.rel (%p196) target = $region32
        $region31: #{tpu_custom_call.1} parent=27 // pred_region
          %200 = dma.done %s192, 128
        $region32: #{tpu_custom_call.1} parent=27 // pred_fallthru
          _
        %s201 = sand.u32 %s82, 1
        %s202 = scalar_lea.sflag [#allocation9], %s201
        %s203 = sand.u32 %s82, 1
        %s204 = smul.addr %s203, 8
        %s205 = scalar_lea.vmem [#allocation8], %s204
        // Predicated region
        $region33: #{tpu_custom_call.1} parent=27 // pred_check
          %p206 = pneg %p95
        $region34: #{tpu_custom_call.1} parent=27 // pred_check_branch
          %208 = sbr.rel (%p206) target = $region36
        $region35: #{tpu_custom_call.1} parent=27 // pred_region
          %210 = dma.done %s202, 128
        $region36: #{tpu_custom_call.1} parent=27 // pred_fallthru
          _
        %s211 = sand.u32 %s50, 1
        %s212 = scalar_lea.sflag [#allocation6], %s211
        %s213 = sand.u32 %s50, 1
        %s214 = smul.addr %s213, 8
        %s215 = scalar_lea.vmem [#allocation5], %s214
        %p216 = pneg %p63
        %p217 = pneg %p60
        %s218 = sand.u32 %s82, 1
        %s219 = scalar_lea.sflag [#allocation9], %s218
        %s220 = sand.u32 %s82, 1
        %s221 = smul.addr %s220, 8
        %s222 = scalar_lea.vmem [#allocation8], %s221
        %p223 = pneg %p95
        %p224 = pneg %p92
        %p225 = pneg %p121
        %p226 = pneg %p118
        %s227 = sand.u32 %s108, 1
        %s228 = scalar_lea.sflag [#allocation7], %s227
        %s229 = sand.u32 %s108, 1
        %s230 = smul.addr %s229, 8
        %s231 = scalar_lea.vmem [#allocation10], %s230
        %s232 = sadd.s32 %s28, %s29
        %p233 = scmp.lt.s32.totalorder %s232, 0
        %s234 = scalar_select %p233, %s232, 0
        %s235 = sadd.s32 %s28, %s29
        %p236 = scmp.lt.s32.totalorder %s235, 0
        %s237 = scalar_select %p236, %s235, 0
        %p238 = scmp.eq.s32.totalorder %s29, 0
        // Predicated region
        $region37: #{tpu_custom_call.1} parent=27 // pred_check
          %p239 = pneg %p238
        $region38: #{tpu_custom_call.1} parent=27 // pred_check_branch
          %241 = sbr.rel (%p239) target = $region40
        $region39: #{tpu_custom_call.1} parent=27 // pred_region
          %242 = vst [vmem:[#allocation2] sm:$0xff] 0.0
        $region40: #{tpu_custom_call.1} parent=27 // pred_fallthru
          _
        %s243 = sld [smem:[#allocation4]]
        %s244 = sadd.s32 %s28, %s29
        %s245 = smul.u32 %s244, 1024
        %s246 = sadd.s32 %s245, 1024
        %p247 = scmp.le.s32.totalorder %s246, %s243
        // Predicated region
        $region41: #{tpu_custom_call.1} parent=27 // pred_check
          %p248 = pneg %p247
        $region42: #{tpu_custom_call.1} parent=27 // pred_check_branch
          %250 = sbr.rel (%p248) target = $region44
        $region43: #{tpu_custom_call.1} parent=27 // pred_region
          %v251 = vld [vmem:[%s195] sm:$0xff]
          %v252 = vld [vmem:[%s205] sm:$0xff]
          %vm253 = vcmp.eq.s32.totalorder %v252, 1
          %v254 = vsub.f32 1.0, %v251
          %v255 = vsel %vm253, %v251, %v254
          %v256 = vlog2.pop %v255
          %v257 = vmul.f32 %v256, 0.6931472
          %v258 = vld [vmem:[#allocation2] sm:$0xff]
          %v259 = vadd.f32 %v257, 0.0
          %v260 = vadd.f32 %v258, %v259
          %261 = vst [vmem:[#allocation2] sm:$0xff] %v260
        $region44: #{tpu_custom_call.1} parent=27 // pred_fallthru
          _
        %p262 = scmp.gt.s32.totalorder %s246, %s243
        // Predicated region
        $region45: #{tpu_custom_call.1} parent=27 // pred_check
          %p263 = pneg %p262
        $region46: #{tpu_custom_call.1} parent=27 // pred_check_branch
          %265 = sbr.rel (%p263) target = $region48
        $region47: #{tpu_custom_call.1} parent=27 // pred_region
          %v266 = vlaneseq
          %v267 = vshrl.u32 %v266, 7
          %v268 = vlaneseq
          %v269 = vand.u32 %v268, 127
          %v270 = vmul.u32 %v267, 128
          %v271 = vadd.s32 %v270, %v269
          %v272 = vld [vmem:[%s195] sm:$0xff]
          %v273 = vld [vmem:[%s205] sm:$0xff]
          %vm274 = vcmp.eq.s32.totalorder %v273, 1
          %v275 = vsub.f32 1.0, %v272
          %v276 = vsel %vm274, %v272, %v275
          %s277 = smul.u32 0, 128
          %s278 = sadd.s32 %s245, %s277
          %v279 = vstv %s278
          %v280 = vadd.s32 %v271, %v279
          %v281 = vstv %s243
          %vm282 = vcmp.lt.s32.totalorder %v280, %v281
          %v283 = vsel %vm282, %v276, 1.0
          %v284 = vlog2.pop %v283
          %v285 = vmul.f32 %v284, 0.6931472
          %v286 = vld [vmem:[#allocation2] sm:$0xff]
          %v287 = vadd.f32 %v285, 0.0
          %v288 = vadd.f32 %v286, %v287
          %289 = vst [vmem:[#allocation2] sm:$0xff] %v288
        $region48: #{tpu_custom_call.1} parent=27 // pred_fallthru
          _
        // Predicated region
        $region49: #{tpu_custom_call.1} parent=27 // pred_check
          %p290 = pneg %p238
        $region50: #{tpu_custom_call.1} parent=27 // pred_check_branch
          %292 = sbr.rel (%p290) target = $region52
        $region51: #{tpu_custom_call.1} parent=27 // pred_region
          %v293 = vld [vmem:[#allocation2] sm:$0xff]
          %294 = vst [vmem:[%s231] sm:$0xff] %v293
        $region52: #{tpu_custom_call.1} parent=27 // pred_fallthru
          _
        %s295 = sand.u32 %s108, 1
        %s296 = scalar_lea.sflag [#allocation7], %s295
        %s297 = sand.u32 %s108, 1
        %s298 = smul.addr %s297, 8
        %s299 = scalar_lea.vmem [#allocation10], %s298
        // Predicated region
        $region53: #{tpu_custom_call.1} parent=27 // pred_check
          %p300 = pneg %p118
        $region54: #{tpu_custom_call.1} parent=27 // pred_check_branch
          %302 = sbr.rel (%p300) target = $region56
        $region55: #{tpu_custom_call.1} parent=27 // pred_region
          %304 = vsyncadd %s296, 0
          %s305 = smul.addr %s28, 8
          %s306 = scalar_lea.hbm %s3, %s305
          %s308 = sshll.u32 %s299, 4
          %s309 = int_to_ptr.vmem [resolvable:$true] %s308
          %s310 = sshll.u32 %s306, 4
          %s311 = int_to_ptr.hbm [resolvable:$true] %s310
          %313 = dma.vmem_to_hbm [thread:$0]  %s309, 128, %s311, %s296
        $region56: #{tpu_custom_call.1} parent=27 // pred_fallthru
          _
      $region28: #{tpu_custom_call.1} parent=5 // pred_fallthru
        _
      %p314 = scmp.le.s32.totalorder 2, %s19
      // Predicated region
      $region57: #{tpu_custom_call.1} parent=5 // pred_check
        %p315 = pneg %p314
      $region58: #{tpu_custom_call.1} parent=5 // pred_check_branch
        %317 = sbr.rel (%p315) target = $region60
      $region59: #{tpu_custom_call.1} parent=5 // pred_region
        %s318 = ssub.s32 %s19, 2
        // Predicated region
        $region61: #{tpu_custom_call.1} parent=59 // pred_check
          %p319 = pneg %p124
        $region62: #{tpu_custom_call.1} parent=59 // pred_check_branch
          %321 = sbr.rel (%p319) target = $region64
        $region63: #{tpu_custom_call.1} parent=59 // pred_region
          %s322 = sand.u32 %s109, 1
          %s323 = scalar_lea.sflag [#allocation7], %s322
          %s324 = sand.u32 %s109, 1
          %s325 = smul.addr %s324, 8
          %s326 = scalar_lea.vmem [#allocation10], %s325
          %328 = dma.done %s323, 128
        $region64: #{tpu_custom_call.1} parent=59 // pred_fallthru
          _
      $region60: #{tpu_custom_call.1} parent=5 // pred_fallthru
        _
    $region6: #{tpu_custom_call.1} parent=1 // loop_footer
      %s23 = sadd.s32 1, %s19
    $region7: #{tpu_custom_call.1} parent=1 // loop_footer_branch
      %18 = sbr.rel target = $region3
    $region8: #{tpu_custom_call.1} parent=1 // loop_exit
      _
    %329 = vsyncpa [#allocation6], 1
    %s330 = scalar_lea.sflag [#allocation6], 1
    %331 = vsyncpa %s330, 1
    %332 = vsyncpa [#allocation9], 1
    %s333 = scalar_lea.sflag [#allocation9], 1
    %334 = vsyncpa %s333, 1
    %335 = vsyncpa [#allocation7], 1
    %s336 = scalar_lea.sflag [#allocation7], 1
    %337 = vsyncpa %s336, 1

</llo_original>
